<compile_context>
chip_gen: v5e
topology: v5e:2x2
jax: 0.10.0
libtpu: 0.0.40
codegen_flags: <defaults>
</compile_context>

<pallas_src>
import functools

import jax
import jax.numpy as jnp
from jax.experimental import pallas as pl
from jax.experimental.pallas import tpu as pltpu


def _round_up(x: int, m: int) -> int:
    return ((x + m - 1) // m) * m


def _gap_kernel(x_ref, out_ref, *, inv_count: float):
    # x_ref: (TM, TL) tile of the flattened input; out_ref: (TM, 1) accumulator
    # resident across the reduction (last) grid axis.
    j = pl.program_id(1)

    @pl.when(j == 0)
    def _():
        out_ref[...] = jnp.zeros_like(out_ref)

    out_ref[...] += jnp.sum(x_ref[...].astype(jnp.float32), axis=1, keepdims=True)

    @pl.when(j == pl.num_programs(1) - 1)
    def _():
        out_ref[...] = out_ref[...] * inv_count


def global_avg_pool(x, *, tm_max: int = 512, tl_max: int = 2048):
    """Mean over the last two dims: (..., H, W) -> (...,). Matches
    x.view(*x.shape[:-2], -1).mean(-1) from the PyTorch module."""
    assert x.ndim >= 2, "GlobalAvgPool needs at least 2 dims"
    lead = x.shape[:-2]
    H, W = x.shape[-2], x.shape[-1]
    L = H * W
    M = 1
    for d in lead:
        M *= d

    # Flatten to (M, L) — contiguous view, no data movement.
    xf = x.reshape(M, L)

    # Tile sizes: lane-aligned reduction tiles, sublane-aligned row tiles.
    # tm_max * tl_max * 4B = 4 MiB per in-flight input buffer -> ~8 MiB with
    # double-buffering; safe under every generation's scoped-VMEM default
    # (v5e 16 MiB, v6e/v7x 32 MiB).
    TL = min(_round_up(L, 128), tl_max)
    Lp = _round_up(L, TL)
    TM = min(_round_up(M, 8), tm_max)
    Mp = _round_up(M, TM)

    if (Mp, Lp) != (M, L):
        # Zero padding: padded columns add 0 to the sum (we divide by the true
        # count L); padded rows are sliced off below.
        xf = jnp.pad(xf, ((0, Mp - M), (0, Lp - L)))

    grid = (Mp // TM, Lp // TL)
    kernel = functools.partial(_gap_kernel, inv_count=1.0 / float(L))

    out = pl.pallas_call(
        kernel,
        out_shape=jax.ShapeDtypeStruct((Mp, 1), jnp.float32),
        grid=grid,
        in_specs=[
            pl.BlockSpec((TM, TL), lambda i, j: (i, j)),
        ],
        out_specs=pl.BlockSpec((TM, 1), lambda i, j: (i, 0)),
        compiler_params=pltpu.CompilerParams(
            dimension_semantics=("parallel", "arbitrary"),
        ),
        cost_estimate=pl.CostEstimate(
            flops=Mp * Lp,
            transcendentals=0,
            bytes_accessed=Mp * Lp * xf.dtype.itemsize + Mp * 4,
        ),
    )(xf)

    out = out[:M, 0].astype(x.dtype)
    return out.reshape(lead)


if __name__ == "__main__":
    key = jax.random.PRNGKey(0)
    k1, k2 = jax.random.split(key, 2)

    # Primary test: shapes consistent with the module's typical NCHW usage.
    N, C, H, W = 2, 4, 16, 16
    x = jax.random.normal(k1, (N, C, H, W), dtype=jnp.float32)

    out = global_avg_pool(x)
    out = jax.block_until_ready(out)

    ref = x.reshape(N, C, -1).mean(-1)
    assert out.shape == (N, C), out.shape
    assert jnp.allclose(out, ref, atol=1e-5, rtol=1e-5), float(
        jnp.max(jnp.abs(out - ref)))

    # Secondary test: non-aligned M and L to exercise the padding/tiling path.
    x2 = jax.random.normal(k2, (2, 3, 20, 20), dtype=jnp.float32)
    out2 = jax.block_until_ready(global_avg_pool(x2))
    ref2 = x2.reshape(2, 3, -1).mean(-1)
    assert out2.shape == (2, 3), out2.shape
    assert jnp.allclose(out2, ref2, atol=1e-5, rtol=1e-5), float(
        jnp.max(jnp.abs(out2 - ref2)))

    print("KERNEL_OK")
</pallas_src>

<mosaic_0001>
module attributes {stable_mosaic.version = 11 : i64} {
  func.func @_gap_kernel(%arg0: i32, %arg1: i32, %arg2: memref<8x256xf32, #tpu.memory_space<vmem>>, %arg3: memref<8x1xf32, #tpu.memory_space<vmem>>) attributes {dimension_semantics = [#tpu.dimension_semantics<parallel>, #tpu.dimension_semantics<arbitrary>], iteration_bounds = array<i64: 1, 1>, scalar_prefetch = 0 : i64, scratch_operands = 0 : i64, tpu.core_type = #tpu.core_type<tc>, window_params = [{transform_indices = @transform_0, window_bounds = array<i64: 8, 256>}, {transform_indices = @transform_1, window_bounds = array<i64: 8, 1>}]} {
    %c0_i32 = arith.constant 0 : i32
    %0 = arith.cmpi eq, %arg1, %c0_i32 : i32
    %1 = arith.extui %0 : i1 to i32
    %c0_i32_0 = arith.constant 0 : i32
    %2 = arith.cmpi ne, %1, %c0_i32_0 : i32
    scf.if %2 {
      %cst_8 = arith.constant 0.000000e+00 : f32
      %12 = vector.broadcast %cst_8 : f32 to vector<8x1xf32>
      %c0_9 = arith.constant 0 : index
      %c0_10 = arith.constant 0 : index
      %13 = vector.load %arg3[%c0_9, %c0_10] : memref<8x1xf32, #tpu.memory_space<vmem>>, vector<8x1xf32>
      tpu.vector_store %arg3[%c0_9, %c0_10], %12 {strides = array<i32>} : memref<8x1xf32, #tpu.memory_space<vmem>>, vector<8x1xf32>,
    } else {
    }
    %c0 = arith.constant 0 : index
    %c0_1 = arith.constant 0 : index
    %3 = vector.load %arg3[%c0, %c0_1] : memref<8x1xf32, #tpu.memory_space<vmem>>, vector<8x1xf32>
    %c0_2 = arith.constant 0 : index
    %c0_3 = arith.constant 0 : index
    %4 = vector.load %arg2[%c0_2, %c0_3] : memref<8x256xf32, #tpu.memory_space<vmem>>, vector<8x256xf32>
    %cst = arith.constant dense<0.000000e+00> : vector<8xf32>
    %5 = vector.multi_reduction <add>, %4, %cst [1] : vector<8x256xf32> to vector<8xf32>
    %6 = vector.shape_cast %5 : vector<8xf32> to vector<8x1xf32>
    %7 = arith.addf %3, %6 : vector<8x1xf32>
    %c0_4 = arith.constant 0 : index
    %c0_5 = arith.constant 0 : index
    %8 = vector.load %arg3[%c0_4, %c0_5] : memref<8x1xf32, #tpu.memory_space<vmem>>, vector<8x1xf32>
    tpu.vector_store %arg3[%c0_4, %c0_5], %7 {strides = array<i32>} : memref<8x1xf32, #tpu.memory_space<vmem>>, vector<8x1xf32>,
    %c0_i32_6 = arith.constant 0 : i32
    %9 = arith.cmpi eq, %arg1, %c0_i32_6 : i32
    %10 = arith.extui %9 : i1 to i32
    %c0_i32_7 = arith.constant 0 : i32
    %11 = arith.cmpi ne, %10, %c0_i32_7 : i32
    scf.if %11 {
      %c0_8 = arith.constant 0 : index
      %c0_9 = arith.constant 0 : index
      %12 = vector.load %arg3[%c0_8, %c0_9] : memref<8x1xf32, #tpu.memory_space<vmem>>, vector<8x1xf32>
      %cst_10 = arith.constant 3.906250e-03 : f32
      %13 = vector.broadcast %cst_10 : f32 to vector<8x1xf32>
      %14 = arith.mulf %12, %13 : vector<8x1xf32>
      %c0_11 = arith.constant 0 : index
      %c0_12 = arith.constant 0 : index
      %15 = vector.load %arg3[%c0_11, %c0_12] : memref<8x1xf32, #tpu.memory_space<vmem>>, vector<8x1xf32>
      tpu.vector_store %arg3[%c0_11, %c0_12], %14 {strides = array<i32>} : memref<8x1xf32, #tpu.memory_space<vmem>>, vector<8x1xf32>,
    } else {
    }
    return
  }
  func.func @transform_0(%arg0: i32, %arg1: i32) -> (i32, i32) {
    %c0_i32 = arith.constant 0 : i32
    return %arg0, %arg1 : i32, i32
  }
  func.func @transform_1(%arg0: i32, %arg1: i32) -> (i32, i32) {
    %c0_i32 = arith.constant 0 : i32
    %c0_i32_0 = arith.constant 0 : i32
    return %arg0, %c0_i32 : i32, i32
  }
}

</mosaic_0001>

<llo_original>
// kernel: tpu_custom_call.1
$region0: #{tpu_custom_call.1}
  #allocation0 [shape = 'u32[]', space=smem, size = 0x4, offset = 0x4, fixed_abs, tag = 'smem constant byte address 0x4 - core index']
  #allocation1 [shape = 'u32[72,128]{1,0:T(1,128)}', space=vmem, size = 0x9000, scoped, tag = 'internal scratch']
  %s0 = inlined_call_operand.hbm [shape: f32[8,256], index: 0, kind: input, shape index: {}]
  %s1 = inlined_call_operand.vmem [shape: f32[8,1], index: 1, kind: output, shape index: {}]
  %s2 = sld [smem:[#allocation0]]
  $region26: #{tpu_custom_call.1} parent=0
    _
  %s4 = ssub.s32 1, %s2
  %s5 = scalar_select 0, %s4, %s2
  $region1: #{tpu_custom_call.1} parent=0
    #allocation2 [shape = 'u8[8192]{0}', space=vmem, size = 0x2000, scoped, tag = 'input window, operand 0, single buffered']
    #allocation3 [shape = 's32[1]{0}', space=sflag, size = 0x4, scoped, tag = 'scoped memory for tpu_custom_call.1']
    %6 = vsyncpa [#allocation3], 0
    // Predicated region
    $region2: #{tpu_custom_call.1} parent=1 // pred_check
      _
    $region3: #{tpu_custom_call.1} parent=1 // pred_check_branch
      %8 = sbr.rel (0) target = $region5
    $region4: #{tpu_custom_call.1} parent=1 // pred_region
      %10 = vsyncadd [#allocation3], 0
      %s12 = sshll.u32 %s0, 4
      %s13 = int_to_ptr.hbm [resolvable:$true] %s12
      %s14 = sshll.u32 [#allocation2], 4
      %s15 = int_to_ptr.vmem [resolvable:$true] %s14
      %17 = dma.hbm_to_vmem [thread:$0]  %s13, 256, %s15, [#allocation3]
    $region5: #{tpu_custom_call.1} parent=1 // pred_fallthru
      _
    // Predicated region
    $region6: #{tpu_custom_call.1} parent=1 // pred_check
      _
    $region7: #{tpu_custom_call.1} parent=1 // pred_check_branch
      %19 = sbr.rel (0) target = $region9
    $region8: #{tpu_custom_call.1} parent=1 // pred_region
      %21 = dma.done [#allocation3], 256
    $region9: #{tpu_custom_call.1} parent=1 // pred_fallthru
      _
    %p22 = scmp.eq.s32.totalorder 0, 0
    // Predicated region
    $region10: #{tpu_custom_call.1} parent=1 // pred_check
      %p23 = pneg %p22
    $region11: #{tpu_custom_call.1} parent=1 // pred_check_branch
      %25 = sbr.rel (%p23) target = $region13
    $region12: #{tpu_custom_call.1} parent=1 // pred_region
      %vm26 = vcmask 7168
      %27 = vst.msk [vmem:[%s1] sm:$0xff] %vm26, 0.0
    $region13: #{tpu_custom_call.1} parent=1 // pred_fallthru
      _
    %v28 = vld [vmem:[%s1] sm:$0xff]
    %v29 = vld [vmem:[#allocation2] sm:$0xff]
    %v30 = vld [vmem:[#allocation2 + $0x8] sm:$0xff]
    %v31 = vadd.f32 %v29, %v30
    %32 = vadd.xlane.f32.xlu0 %v31
    %v33 = vpop.xlane.xlu0 %32
    %v34 = vadd.f32 %v28, %v33
    %vm35 = vcmask 7168
    %36 = vst.msk [vmem:[%s1] sm:$0xff] %vm35, %v34
    // Predicated region
    $region14: #{tpu_custom_call.1} parent=1 // pred_check
      %p37 = pneg %p22
    $region15: #{tpu_custom_call.1} parent=1 // pred_check_branch
      %39 = sbr.rel (%p37) target = $region17
    $region16: #{tpu_custom_call.1} parent=1 // pred_region
      %v40 = vld [vmem:[%s1] sm:$0xff]
      %v41 = vmul.f32 %v40, 0.00390625
      %42 = vst.msk [vmem:[%s1] sm:$0xff] %vm35, %v41
    $region17: #{tpu_custom_call.1} parent=1 // pred_fallthru
      _
    // Predicated region
    $region18: #{tpu_custom_call.1} parent=1 // pred_check
      _
    $region19: #{tpu_custom_call.1} parent=1 // pred_check_branch
      %44 = sbr.rel (0) target = $region21
    $region20: #{tpu_custom_call.1} parent=1 // pred_region
      _
    $region21: #{tpu_custom_call.1} parent=1 // pred_fallthru
      _
    // Predicated region
    $region22: #{tpu_custom_call.1} parent=1 // pred_check
      _
    $region23: #{tpu_custom_call.1} parent=1 // pred_check_branch
      %46 = sbr.rel (0) target = $region25
    $region24: #{tpu_custom_call.1} parent=1 // pred_region
      _
    $region25: #{tpu_custom_call.1} parent=1 // pred_fallthru
      _
    %47 = vsyncpa [#allocation3], 1

</llo_original>
